<compile_context>
chip_gen: v7x
topology: tpu7x:2x2x1
jax: 0.10.0
libtpu: 0.0.40
codegen_flags: <defaults>
</compile_context>

<pallas_src>
import functools

import jax
import jax.numpy as jnp
from jax.experimental import pallas as pl
from jax.experimental.pallas import tpu as pltpu


# Below this many bytes the pallas_call launch/grid overhead dwarfs the
# memory-bound work; let XLA fuse the pure-JAX slice-add path instead.
_SMALL_FALLBACK_BYTES = 2 * 1024 * 1024

# Target bytes for one (rows, width) input tile.
_TARGET_TILE_BYTES = 4 * 1024 * 1024

_MAX_BLOCK_ROWS = 4096

# Explicit scoped-VMEM limit: > v5e's 16 MiB default, <= v7x's 64 MiB physical.
_VMEM_LIMIT_BYTES = 32 * 1024 * 1024

_LANE = 128


def _sublane_align(itemsize: int) -> int:
    # f32: 8, bf16: 16, int8/fp8: 32
    return 8 * max(1, 4 // itemsize)


def _pick_block_rows(n_rows: int, width: int, itemsize: int,
                     target_bytes: int = _TARGET_TILE_BYTES) -> int:
    """Sublane-aligned row-tile size targeting `target_bytes` per (rows, width) tile."""
    align = _sublane_align(itemsize)
    if n_rows <= 2 * align:
        return n_rows                       # single full-extent block (always legal)
    rows_for_target = (target_bytes // max(1, width * itemsize)) // align * align
    tr = max(align, min(_MAX_BLOCK_ROWS, rows_for_target))
    # Keep at least ~4 row tiles when rows allow so the "parallel" axis can be
    # split across v7x's two TensorCores (harmless on 1-TC v5e/v6e).
    if n_rows >= 4 * align:
        tr = min(tr, max(align, (n_rows // 4) // align * align))
    if tr >= n_rows:
        return n_rows
    return tr


def _full_tile_fits(length: int, itemsize: int) -> bool:
    """Can the full-width path's minimum tile (align rows x L) be double-buffered?"""
    align = _sublane_align(itemsize)
    return 4 * align * length * itemsize <= (_VMEM_LIMIT_BYTES * 3) // 4


# ---------------------------------------------------------------------------
# Full-width path: reads and rewrites every element (L not 128-aligned, etc.)
# ---------------------------------------------------------------------------

def _full_kernel(x_ref, o_ref, *, padding: int):
    """x_ref / o_ref: (rows, L) tile in VMEM; rows are independent."""
    p = padding
    L = x_ref.shape[-1]
    # Lane-dense whole-tile pass-through store; no full-tile value is bound.
    o_ref[...] = x_ref[...]
    # Only the first p and last p lane columns change (masked stores on 2p lanes).
    wrapped = x_ref[:, :p] + x_ref[:, L - p:]
    o_ref[:, :p] = wrapped
    o_ref[:, L - p:] = wrapped


def _full_pallas(x2: jax.Array, padding: int) -> jax.Array:
    R, L = x2.shape
    itemsize = jnp.dtype(x2.dtype).itemsize
    tr = _pick_block_rows(R, L, itemsize)
    grid = (pl.cdiv(R, tr),)
    kernel = functools.partial(_full_kernel, padding=padding)
    return pl.pallas_call(
        kernel,
        out_shape=jax.ShapeDtypeStruct((R, L), x2.dtype),
        grid_spec=pltpu.PrefetchScalarGridSpec(
            num_scalar_prefetch=0,
            grid=grid,
            in_specs=[pl.BlockSpec((tr, L), lambda i: (i, 0))],
            out_specs=pl.BlockSpec((tr, L), lambda i: (i, 0)),
        ),
        cost_estimate=pl.CostEstimate(
            flops=2 * R * padding,
            transcendentals=0,
            bytes_accessed=2 * R * L * itemsize),
        compiler_params=pltpu.CompilerParams(
            dimension_semantics=("parallel",),
            vmem_limit_bytes=_VMEM_LIMIT_BYTES),
    )(x2)


# ---------------------------------------------------------------------------
# Edge-only path: only the first / last 128-lane column blocks are touched.
# ---------------------------------------------------------------------------

def _edge_kernel(head_ref, tail_ref, o_ref, head_snap, tail_snap, *, padding: int):
    """head_ref/tail_ref: (rows, 128) first/last column blocks of the row tile.

    Grid axis 1 has two steps: j=0 writes the head block, j=1 the tail block.
    The output HBM buffer aliases the input, so original values are captured
    into VMEM scratch on the first visit and j=1 reads only the snapshots.
    """
    p = padding
    j = pl.program_id(1)

    @pl.when(j == 0)
    def _():
        # First visit for this row tile: inputs still hold the original values
        # (nothing in this row tile has been written back yet).
        head_snap[...] = head_ref[...]
        tail_snap[...] = tail_ref[...]
        o_ref[...] = head_ref[...]
        o_ref[:, :p] = head_ref[:, :p] + tail_ref[:, _LANE - p:]

    @pl.when(j == 1)
    def _():
        # Head columns of the aliased buffer were already overwritten at j=0;
        # use the snapshots only.
        o_ref[...] = tail_snap[...]
        o_ref[:, _LANE - p:] = tail_snap[:, _LANE - p:] + head_snap[:, :p]


def _edge_pallas(x2: jax.Array, padding: int) -> jax.Array:
    R, L = x2.shape
    itemsize = jnp.dtype(x2.dtype).itemsize
    ncol = L // _LANE                      # >= 2 (eligibility requires L >= 256)
    tr = _pick_block_rows(R, _LANE, itemsize)
    grid = (pl.cdiv(R, tr), 2)
    kernel = functools.partial(_edge_kernel, padding=padding)
    return pl.pallas_call(
        kernel,
        out_shape=jax.ShapeDtypeStruct((R, L), x2.dtype),
        grid_spec=pltpu.PrefetchScalarGridSpec(
            num_scalar_prefetch=0,
            grid=grid,
            in_specs=[
                pl.BlockSpec((tr, _LANE), lambda i, j: (i, 0)),         # head cols
                pl.BlockSpec((tr, _LANE), lambda i, j: (i, ncol - 1)),  # tail cols
            ],
            out_specs=pl.BlockSpec((tr, _LANE),
                                   lambda i, j: (i, j * (ncol - 1))),
            scratch_shapes=[pltpu.VMEM((tr, _LANE), x2.dtype),
                            pltpu.VMEM((tr, _LANE), x2.dtype)],
        ),
        # Middle columns are never written by the grid; they come straight
        # from the aliased buffer (true in-place when the caller donates x,
        # a single defensive copy otherwise).
        input_output_aliases={0: 0},
        cost_estimate=pl.CostEstimate(
            flops=2 * R * padding,
            transcendentals=0,
            bytes_accessed=6 * R * _LANE * itemsize),
        compiler_params=pltpu.CompilerParams(
            dimension_semantics=("parallel", "arbitrary"),
            vmem_limit_bytes=_VMEM_LIMIT_BYTES),
    )(x2, x2)


# ---------------------------------------------------------------------------
# Reference + dispatcher
# ---------------------------------------------------------------------------

def _reference(x: jax.Array, padding: int) -> jax.Array:
    """Pure-JAX reference mirroring the (in-place) PyTorch forward."""
    p = padding
    L = x.shape[-1]
    wrapped = x[:, :, :p] + x[:, :, L - p:]   # both ends receive the same value
    return jnp.concatenate([wrapped, x[:, :, p:L - p], wrapped], axis=-1)


def permute_pad_transpose(x: jax.Array, padding: int = 2, *,
                          force_pallas: bool = False,
                          edge_only=None) -> jax.Array:
    """Functional equivalent of PermutePadTranspose.forward (x: (N, C, L)).

    edge_only: None = auto (use the edge-only in-place kernel when eligible),
    True/False = force preference (still requires eligibility when True).
    """
    N, C, L = x.shape
    p = int(padding)
    if p == 0:
        return x
    if 2 * p > L:
        raise ValueError("padding regions must not overlap (need 2*padding <= L)")

    itemsize = jnp.dtype(x.dtype).itemsize
    edge_eligible = (L % _LANE == 0) and (L >= 2 * _LANE) and (p <= _LANE)
    use_edge = edge_eligible if edge_only is None else (bool(edge_only) and edge_eligible)

    if not force_pallas:
        # Tiny problems: launch overhead > work; let XLA fuse the JAX path.
        if N * C * L * itemsize < _SMALL_FALLBACK_BYTES:
            return _reference(x, p)
        # L < 128 lane-pads every VMEM tile (masked vst on the whole tile);
        # the XLA path is lane-dense.  (Edge path needs L >= 256 anyway.)
        if L < _LANE:
            return _reference(x, p)

    if not use_edge and not _full_tile_fits(L, itemsize):
        # TODO(synk): extremely long, non-128-aligned L would blow the VMEM
        # budget for a full-width tile; let XLA handle that rare shape.
        return _reference(x, p)

    x2 = x.reshape(N * C, L)
    out2 = _edge_pallas(x2, p) if use_edge else _full_pallas(x2, p)
    return out2.reshape(N, C, L)


if __name__ == "__main__":
    key = jax.random.PRNGKey(0)
    k1, k2, k3, k4 = jax.random.split(key, 4)

    # 1) Small shape implied by the module (batch=2, channels=4, length=16),
    #    forced through the full-width Pallas kernel (single (8,16) block).
    x_small = jax.random.normal(k1, (2, 4, 16), dtype=jnp.float32)
    ref_small = _reference(x_small, 2)
    out_small = jax.block_until_ready(
        permute_pad_transpose(x_small, 2, force_pallas=True))
    assert out_small.shape == x_small.shape and out_small.dtype == x_small.dtype
    assert jnp.allclose(out_small, ref_small, atol=1e-6), "small-shape mismatch"
    # Auto-dispatch at this size takes the fused pure-JAX path; check it too.
    assert jnp.allclose(permute_pad_transpose(x_small, 2), ref_small, atol=1e-6)

    # 2) L = 128 (not edge-eligible): full-width path with row tiling and a
    #    partial (masked) last row block (R = 1000 rows, tile = 248).
    x_full = jax.random.normal(k2, (5, 200, 128), dtype=jnp.float32)
    ref_full = _reference(x_full, 2)
    out_full = jax.block_until_ready(
        permute_pad_transpose(x_full, 2, force_pallas=True))
    assert jnp.allclose(out_full, ref_full, atol=1e-6), "full-path mismatch"

    # 3) Edge-only path (L = 512, padding = 5): only the first/last 128-lane
    #    blocks are written; middle columns come from the aliased buffer.
    x_edge = jax.random.normal(k3, (2, 64, 512), dtype=jnp.float32)
    ref_edge = _reference(x_edge, 5)
    out_edge = jax.block_until_ready(
        permute_pad_transpose(x_edge, 5, force_pallas=True))
    assert jnp.allclose(out_edge, ref_edge, atol=1e-6), "edge-path mismatch"

    # 4) bfloat16 edge path with ncol == 2 (L = 256) — degenerate coverage case.
    x_bf16 = jax.random.normal(k4, (2, 8, 256), dtype=jnp.bfloat16)
    ref_bf16 = _reference(x_bf16, 2)
    out_bf16 = jax.block_until_ready(
        permute_pad_transpose(x_bf16, 2, force_pallas=True))
    assert jnp.allclose(out_bf16.astype(jnp.float32),
                        ref_bf16.astype(jnp.float32), atol=1e-2), "bf16 mismatch"

    print("KERNEL_OK")
</pallas_src>

<mosaic_0001>
module attributes {stable_mosaic.version = 11 : i64} {
  func.func @_full_kernel(%arg0: i32, %arg1: memref<8x16xf32, #tpu.memory_space<vmem>>, %arg2: memref<8x16xf32, #tpu.memory_space<vmem>>) attributes {dimension_semantics = [#tpu.dimension_semantics<parallel>], iteration_bounds = array<i64: 1>, scalar_prefetch = 0 : i64, scratch_operands = 0 : i64, tpu.core_type = #tpu.core_type<tc>, window_params = [{transform_indices = @transform_0, window_bounds = array<i64: 8, 16>}, {transform_indices = @transform_1, window_bounds = array<i64: 8, 16>}]} {
    %c0 = arith.constant 0 : index
    %c0_0 = arith.constant 0 : index
    %0 = vector.load %arg1[%c0, %c0_0] : memref<8x16xf32, #tpu.memory_space<vmem>>, vector<8x16xf32>
    %c0_1 = arith.constant 0 : index
    %c0_2 = arith.constant 0 : index
    %1 = vector.load %arg2[%c0_1, %c0_2] : memref<8x16xf32, #tpu.memory_space<vmem>>, vector<8x16xf32>
    tpu.vector_store %arg2[%c0_1, %c0_2], %0 {strides = array<i32>} : memref<8x16xf32, #tpu.memory_space<vmem>>, vector<8x16xf32>,
    %c0_3 = arith.constant 0 : index
    %c0_4 = arith.constant 0 : index
    %2 = vector.load %arg1[%c0_3, %c0_4] : memref<8x16xf32, #tpu.memory_space<vmem>>, vector<8x2xf32>
    %c0_5 = arith.constant 0 : index
    %c14 = arith.constant 14 : index
    %3 = vector.load %arg1[%c0_5, %c14] : memref<8x16xf32, #tpu.memory_space<vmem>>, vector<8x2xf32>
    %4 = arith.addf %2, %3 : vector<8x2xf32>
    %c0_6 = arith.constant 0 : index
    %c0_7 = arith.constant 0 : index
    %5 = vector.load %arg2[%c0_6, %c0_7] : memref<8x16xf32, #tpu.memory_space<vmem>>, vector<8x2xf32>
    tpu.vector_store %arg2[%c0_6, %c0_7], %4 {strides = array<i32>} : memref<8x16xf32, #tpu.memory_space<vmem>>, vector<8x2xf32>,
    %c0_8 = arith.constant 0 : index
    %c14_9 = arith.constant 14 : index
    %6 = vector.load %arg2[%c0_8, %c14_9] : memref<8x16xf32, #tpu.memory_space<vmem>>, vector<8x2xf32>
    tpu.vector_store %arg2[%c0_8, %c14_9], %4 {strides = array<i32>} : memref<8x16xf32, #tpu.memory_space<vmem>>, vector<8x2xf32>,
    return
  }
  func.func @transform_0(%arg0: i32) -> (i32, i32) {
    %c0_i32 = arith.constant 0 : i32
    %c0_i32_0 = arith.constant 0 : i32
    return %arg0, %c0_i32 : i32, i32
  }
  func.func @transform_1(%arg0: i32) -> (i32, i32) {
    %c0_i32 = arith.constant 0 : i32
    %c0_i32_0 = arith.constant 0 : i32
    return %arg0, %c0_i32 : i32, i32
  }
}

</mosaic_0001>

<llo_original>
// kernel: tpu_custom_call.1
$region0: #{tpu_custom_call.1}
  #allocation0 [shape = 'u32[]', space=smem, size = 0x4, offset = 0x4, fixed_abs, tag = 'smem constant byte address 0x4 - core index']
  #allocation1 [shape = 'u32[144,128]{1,0:T(1,128)}', space=vmem, size = 0x12000, scoped, tag = 'internal scratch']
  %s0 = inlined_call_operand.hbm [shape: f32[8,16], index: 0, kind: input, shape index: {}]
  %s1 = inlined_call_operand.hbm [shape: f32[8,16], index: 1, kind: output, shape index: {}]
  %s2 = sld [smem:[#allocation0]]
  $region18: #{tpu_custom_call.1} parent=0
    _
  %s4 = ssub.s32 1, %s2
  %s5 = scalar_select 0, %s4, %s2
  $region1: #{tpu_custom_call.1} parent=0
    #allocation2 [shape = 'u8[4096]{0}', space=vmem, size = 0x1000, scoped, tag = 'input window, operand 0, single buffered']
    #allocation3 [shape = 's32[1]{0}', space=sflag, size = 0x4, scoped, tag = 'scoped memory for tpu_custom_call.1']
    #allocation4 [shape = 's32[1]{0}', space=sflag, size = 0x4, scoped, tag = 'scoped memory for tpu_custom_call.1']
    #allocation5 [shape = 'u8[4096]{0}', space=vmem, size = 0x1000, scoped, tag = 'output window, operand 0, single buffered']
    %6 = vsyncpa [#allocation3], 0
    %7 = vsyncpa [#allocation4], 0
    // Predicated region
    $region2: #{tpu_custom_call.1} parent=1 // pred_check
      _
    $region3: #{tpu_custom_call.1} parent=1 // pred_check_branch
      %9 = sbr.rel (0) target = $region5
    $region4: #{tpu_custom_call.1} parent=1 // pred_region
      %s11 = ssub.s32 128, 128
      %12 = vsyncadd [#allocation3], %s11
      %s14 = sshll.u32 [#allocation2], 4
      %s15 = int_to_ptr.vmem [resolvable:$true] %s14
      %17 = dma.hbm_to_vmem [thread:$0]  %s0, 128, %s15, [#allocation3]
    $region5: #{tpu_custom_call.1} parent=1 // pred_fallthru
      _
    // Predicated region
    $region6: #{tpu_custom_call.1} parent=1 // pred_check
      _
    $region7: #{tpu_custom_call.1} parent=1 // pred_check_branch
      %19 = sbr.rel (0) target = $region9
    $region8: #{tpu_custom_call.1} parent=1 // pred_region
      %20 = dma.done [#allocation3], 128
    $region9: #{tpu_custom_call.1} parent=1 // pred_fallthru
      _
    %v21 = vld [vmem:[#allocation2] sm:$0xff]
    %vm22 = vcmask 130048
    %23 = vst.msk [vmem:[#allocation5] sm:$0xff] %vm22, %v21
    %v24 = vld [vmem:[#allocation2] sm:$0xff]
    %26 = vrot.lane.b32.xlu0 %v24, 114
    %v27 = vpop.permute.xlu0 %26
    %v29 = vadd.f32 %v24, %v27
    %vm30 = vcmask 15360
    %31 = vst.msk [vmem:[#allocation5] sm:$0xff] %vm30, %v29
    %33 = vrot.lane.b32.xlu0 %v29, 14
    %v34 = vpop.permute.xlu0 %33
    %vm36 = vcmask 130160
    %37 = vst.msk [vmem:[#allocation5] sm:$0xff] %vm36, %v34
    // Predicated region
    $region10: #{tpu_custom_call.1} parent=1 // pred_check
      _
    $region11: #{tpu_custom_call.1} parent=1 // pred_check_branch
      %39 = sbr.rel (0) target = $region13
    $region12: #{tpu_custom_call.1} parent=1 // pred_region
      %s41 = ssub.s32 128, 128
      %42 = vsyncadd [#allocation4], %s41
      %s44 = sshll.u32 [#allocation5], 4
      %s45 = int_to_ptr.vmem [resolvable:$true] %s44
      %47 = dma.vmem_to_hbm [thread:$0]  %s45, 128, %s1, [#allocation4]
    $region13: #{tpu_custom_call.1} parent=1 // pred_fallthru
      _
    // Predicated region
    $region14: #{tpu_custom_call.1} parent=1 // pred_check
      _
    $region15: #{tpu_custom_call.1} parent=1 // pred_check_branch
      %49 = sbr.rel (0) target = $region17
    $region16: #{tpu_custom_call.1} parent=1 // pred_region
      %50 = dma.done [#allocation4], 128
    $region17: #{tpu_custom_call.1} parent=1 // pred_fallthru
      _
    %51 = vsyncpa [#allocation3], 1
    %52 = vsyncpa [#allocation4], 1

</llo_original>
